<compile_context>
chip_gen: v7x
topology: tpu7x:2x2x1
jax: 0.10.0
libtpu: 0.0.40
codegen_flags: <defaults>
</compile_context>

<pallas_src>
import jax
import jax.numpy as jnp
from jax.experimental import pallas as pl
from jax.experimental.pallas import tpu as pltpu


CLASS_NUM = 2
GAMMA = 2.0           # compile-time constant (module default); == 2 -> explicit square
MAX_COLS = 8192       # max lane width of the 2-D view (keeps blocks VMEM-friendly)
FALLBACK_COLS = 512   # lane width for the (rare) padded fallback path


def _round_up(x, m):
    return ((x + m - 1) // m) * m


def _round_down(x, m):
    return (x // m) * m


def _pick_cols(total, max_cols=MAX_COLS):
    """Largest multiple of 128 that divides `total` and is <= max_cols, or None."""
    hi = min(max_cols, _round_down(total, 128))
    for c in range(hi, 0, -128):
        if total % c == 0:
            return c
    return None


def _target_block_elems():
    """Per-block element budget (f32) by TPU generation."""
    try:
        kind = jax.devices()[0].device_kind.lower()
    except Exception:  # pragma: no cover - defensive; fall back to conservative
        kind = ""
    if "v6" in kind or "v7" in kind:
        # 4 MiB f32 blocks -> 3 arrays * 2 buffers * 4 MiB = 24 MiB < 32 MiB scoped VMEM.
        return 1024 * 1024
    # Conservative (v5e and older): 2 MiB blocks -> 12 MiB double-buffered < 16 MiB.
    return 1024 * 512


def focal_loss_kernel(alpha_ref, x_ref, t_ref, o_ref):
    """Elementwise focal loss on one (tile_m, cols) tile.

    alpha_ref : SMEM (CLASS_NUM,) f32   -- per-class alpha table (scalar prefetch)
    x_ref     : VMEM (tile_m, cols)     -- inputs (probabilities in (0,1))
    t_ref     : VMEM (tile_m, cols)     -- targets (0/1 class ids, any numeric dtype)
    o_ref     : VMEM (tile_m, cols)     -- elementwise focal loss
    """
    x = x_ref[...].astype(jnp.float32)
    t = t_ref[...].astype(jnp.float32)

    # alpha = zeros_like(targets); alpha[targets == ii] = alpha_table[ii]
    # Kept as a where-chain so out-of-range targets get alpha = 0 (exact
    # PyTorch semantics).  Static unroll over the tiny class count.
    a = jnp.float32(0.0)
    for ii in range(CLASS_NUM):
        a = jnp.where(t == jnp.float32(ii), alpha_ref[ii], a)

    # probs = x*t + (1-x)*(1-t), expanded to cut temporaries / vreg pressure.
    probs = 1.0 - x - t + 2.0 * (x * t)
    omp = 1.0 - probs
    if GAMMA == 2.0:
        focal = omp * omp                 # no float pow / extra EUP traffic
    else:  # general gamma fallback (adds exp+log on the EUP)
        focal = jnp.power(omp, jnp.float32(GAMMA))

    # Exactly one transcendental (log) per element.
    o_ref[...] = (-(a * focal) * jnp.log(probs)).astype(o_ref.dtype)


def focal_loss(inputs, targets, alpha_table):
    """inputs/targets: same-shape arrays (targets hold 0/1 class ids).
    alpha_table: (CLASS_NUM,) weights.  Returns the elementwise loss."""
    orig_shape = inputs.shape
    out_dtype = inputs.dtype
    total = int(inputs.size)

    cols = _pick_cols(total)
    if cols is not None:
        # Zero-copy path: contiguous reshape (metadata only) to a lane-dense
        # slab; ragged rows handled by the cdiv grid / masked partial blocks.
        rows = total // cols
        x2 = inputs.reshape(rows, cols)
        t2 = targets.reshape(rows, cols)
        padded = False
    else:
        # Rare fallback: total is not a multiple of 128 -> flatten + pad tail.
        # Pad x with 0.5 / t with 0 so log(probs) stays finite in the
        # (discarded) padded region.
        cols = FALLBACK_COLS
        rows = -(-total // cols)
        pad = rows * cols - total
        x_flat = inputs.reshape(-1)
        t_flat = targets.reshape(-1)
        if pad:
            x_flat = jnp.concatenate(
                [x_flat, jnp.full((pad,), 0.5, x_flat.dtype)])
            t_flat = jnp.concatenate(
                [t_flat, jnp.zeros((pad,), t_flat.dtype)])
        x2 = x_flat.reshape(rows, cols)
        t2 = t_flat.reshape(rows, cols)
        padded = True

    # Row tile: aim for the per-generation block budget, keep the sublane dim
    # a multiple of 8, and split into >= 2 blocks when possible so both v7x
    # TensorCores get work (grid axis is "parallel").
    tile_m = max(8, _round_down(max(_target_block_elems() // cols, 8), 8))
    if rows <= tile_m:
        if rows >= 16:
            tile_m = _round_up(-(-rows // 2), 8)   # 2 blocks -> megacore
        else:
            tile_m = rows                          # single full-extent block
    grid_m = -(-rows // tile_m)

    out = pl.pallas_call(
        focal_loss_kernel,
        out_shape=jax.ShapeDtypeStruct((rows, cols), out_dtype),
        grid_spec=pltpu.PrefetchScalarGridSpec(
            num_scalar_prefetch=1,
            grid=(grid_m,),
            in_specs=[
                pl.BlockSpec((tile_m, cols), lambda i, alpha: (i, 0)),
                pl.BlockSpec((tile_m, cols), lambda i, alpha: (i, 0)),
            ],
            out_specs=pl.BlockSpec((tile_m, cols), lambda i, alpha: (i, 0)),
        ),
        compiler_params=pltpu.CompilerParams(
            dimension_semantics=("parallel",),
        ),
    )(alpha_table.astype(jnp.float32), x2, t2)

    if padded:
        out = out.reshape(-1)[:total]
    return out.reshape(orig_shape)


def focal_loss_ref(inputs, targets, alpha_table):
    """Pure-JAX reference mirroring the PyTorch forward (f32)."""
    a = jnp.zeros_like(targets)
    for ii in range(CLASS_NUM):
        a = jnp.where(targets == ii, alpha_table[ii], a)
    probs = inputs * targets + (1.0 - inputs) * (1.0 - targets)
    return -a * jnp.power(1.0 - probs, GAMMA) * jnp.log(probs)


if __name__ == "__main__":
    key = jax.random.PRNGKey(0)
    k1, k2 = jax.random.split(key)

    N, C, H, W = 2, 4, 16, 16  # NCHW, total = 2048 elements

    # inputs are probabilities in (0, 1); targets are binary 0/1 maps.
    logits = jax.random.normal(k1, (N, C, H, W), dtype=jnp.float32)
    inputs = jax.nn.sigmoid(logits)
    targets = (jax.random.uniform(k2, (N, C, H, W)) > 0.5).astype(jnp.float32)

    # FocalLoss(class_num=2) default alpha = ones(class_num, 1)
    alpha_table = jnp.ones((CLASS_NUM,), dtype=jnp.float32)

    out = focal_loss(inputs, targets, alpha_table)
    out = jax.block_until_ready(out)

    ref = focal_loss_ref(inputs, targets, alpha_table)
    assert out.shape == (N, C, H, W)
    assert jnp.allclose(out, ref, atol=1e-5, rtol=1e-5), "mismatch vs reference"

    print("KERNEL_OK")
</pallas_src>

<mosaic_0001>
module attributes {stable_mosaic.version = 11 : i64} {
  func.func @focal_loss_kernel(%arg0: i32, %arg1: memref<2xf32, #tpu.memory_space<smem>>, %arg2: memref<1x2048xf32, #tpu.memory_space<vmem>>, %arg3: memref<1x2048xf32, #tpu.memory_space<vmem>>, %arg4: memref<1x2048xf32, #tpu.memory_space<vmem>>) attributes {dimension_semantics = [#tpu.dimension_semantics<parallel>], iteration_bounds = array<i64: 1>, scalar_prefetch = 1 : i64, scratch_operands = 0 : i64, tpu.core_type = #tpu.core_type<tc>, window_params = [{transform_indices = @transform_0, window_bounds = array<i64: 1, 2048>}, {transform_indices = @transform_1, window_bounds = array<i64: 1, 2048>}, {transform_indices = @transform_2, window_bounds = array<i64: 1, 2048>}]} {
    %c0 = arith.constant 0 : index
    %c0_0 = arith.constant 0 : index
    %0 = vector.load %arg2[%c0, %c0_0] : memref<1x2048xf32, #tpu.memory_space<vmem>>, vector<1x2048xf32>
    %c0_1 = arith.constant 0 : index
    %c0_2 = arith.constant 0 : index
    %1 = vector.load %arg3[%c0_1, %c0_2] : memref<1x2048xf32, #tpu.memory_space<vmem>>, vector<1x2048xf32>
    %cst = arith.constant 0.000000e+00 : f32
    %2 = vector.broadcast %cst : f32 to vector<1x2048xf32>
    %3 = arith.cmpf oeq, %1, %2 : vector<1x2048xf32>
    %c0_3 = arith.constant 0 : index
    %4 = memref.load %arg1[%c0_3] : memref<2xf32, #tpu.memory_space<smem>>
    %cst_4 = arith.constant 0.000000e+00 : f32
    %5 = vector.broadcast %4 : f32 to vector<1x2048xf32>
    %6 = vector.broadcast %cst_4 : f32 to vector<1x2048xf32>
    %7 = arith.select %3, %5, %6 : vector<1x2048xi1>, vector<1x2048xf32>
    %cst_5 = arith.constant 1.000000e+00 : f32
    %8 = vector.broadcast %cst_5 : f32 to vector<1x2048xf32>
    %9 = arith.cmpf oeq, %1, %8 : vector<1x2048xf32>
    %c1 = arith.constant 1 : index
    %10 = memref.load %arg1[%c1] : memref<2xf32, #tpu.memory_space<smem>>
    %11 = vector.broadcast %10 : f32 to vector<1x2048xf32>
    %12 = arith.select %9, %11, %7 : vector<1x2048xi1>, vector<1x2048xf32>
    %cst_6 = arith.constant 1.000000e+00 : f32
    %13 = vector.broadcast %cst_6 : f32 to vector<1x2048xf32>
    %14 = arith.subf %13, %0 : vector<1x2048xf32>
    %15 = arith.subf %14, %1 : vector<1x2048xf32>
    %16 = arith.mulf %0, %1 : vector<1x2048xf32>
    %cst_7 = arith.constant 2.000000e+00 : f32
    %17 = vector.broadcast %cst_7 : f32 to vector<1x2048xf32>
    %18 = arith.mulf %17, %16 : vector<1x2048xf32>
    %19 = arith.addf %15, %18 : vector<1x2048xf32>
    %cst_8 = arith.constant 1.000000e+00 : f32
    %20 = vector.broadcast %cst_8 : f32 to vector<1x2048xf32>
    %21 = arith.subf %20, %19 : vector<1x2048xf32>
    %22 = arith.mulf %21, %21 : vector<1x2048xf32>
    %23 = arith.mulf %12, %22 : vector<1x2048xf32>
    %cst_9 = arith.constant 0.000000e+00 : f32
    %24 = vector.broadcast %cst_9 : f32 to vector<1x2048xf32>
    %25 = arith.subf %24, %23 : vector<1x2048xf32>
    %26 = math.log %19 : vector<1x2048xf32>
    %27 = arith.mulf %25, %26 : vector<1x2048xf32>
    %c0_10 = arith.constant 0 : index
    %c0_11 = arith.constant 0 : index
    %28 = vector.load %arg4[%c0_10, %c0_11] : memref<1x2048xf32, #tpu.memory_space<vmem>>, vector<1x2048xf32>
    tpu.vector_store %arg4[%c0_10, %c0_11], %27 {strides = array<i32>} : memref<1x2048xf32, #tpu.memory_space<vmem>>, vector<1x2048xf32>,
    return
  }
  func.func @transform_0(%arg0: i32, %arg1: memref<2xf32, #tpu.memory_space<smem>>) -> (i32, i32) {
    %c0_i32 = arith.constant 0 : i32
    %c0_i32_0 = arith.constant 0 : i32
    return %arg0, %c0_i32 : i32, i32
  }
  func.func @transform_1(%arg0: i32, %arg1: memref<2xf32, #tpu.memory_space<smem>>) -> (i32, i32) {
    %c0_i32 = arith.constant 0 : i32
    %c0_i32_0 = arith.constant 0 : i32
    return %arg0, %c0_i32 : i32, i32
  }
  func.func @transform_2(%arg0: i32, %arg1: memref<2xf32, #tpu.memory_space<smem>>) -> (i32, i32) {
    %c0_i32 = arith.constant 0 : i32
    %c0_i32_0 = arith.constant 0 : i32
    return %arg0, %c0_i32 : i32, i32
  }
}

</mosaic_0001>

<llo_original>
// kernel: tpu_custom_call.1
$region0: #{tpu_custom_call.1}
  #allocation0 [shape = 'u32[]', space=smem, size = 0x4, offset = 0x4, fixed_abs, tag = 'smem constant byte address 0x4 - core index']
  #allocation1 [shape = 'u32[144,128]{1,0:T(1,128)}', space=vmem, size = 0x12000, scoped, tag = 'internal scratch']
  #allocation2 [shape = 's32[1]{0}', space=sflag, size = 0x4, scoped, tag = 'scoped memory for tpu_custom_call.1']
  #allocation3 [shape = 'u8[512]{0}', space=smem, size = 0x200, scoped, tag = 'prefetched SMEM operand 0']
  %s0 = inlined_call_operand.hbm [shape: f32[2], index: 0, kind: input, shape index: {}]
  %s1 = inlined_call_operand.hbm [shape: f32[1,2048], index: 1, kind: input, shape index: {}]
  %s2 = inlined_call_operand.hbm [shape: f32[1,2048], index: 2, kind: input, shape index: {}]
  %s3 = inlined_call_operand.hbm [shape: f32[1,2048], index: 3, kind: output, shape index: {}]
  %s4 = sld [smem:[#allocation0]]
  $region26: #{tpu_custom_call.1} parent=0
    _
  %s6 = ssub.s32 1, %s4
  %s7 = scalar_select 0, %s6, %s4
  %9 = dma.hbm_to_smem %s0, 16, [#allocation3], [#allocation2]
  %10 = dma.done [#allocation2], 16
  %11 = sfence
  $region1: #{tpu_custom_call.1} parent=0
    #allocation4 [shape = 'u8[8192]{0}', space=vmem, size = 0x2000, scoped, tag = 'input window, operand 1, single buffered']
    #allocation5 [shape = 's32[1]{0}', space=sflag, size = 0x4, scoped, tag = 'scoped memory for tpu_custom_call.1']
    #allocation6 [shape = 's32[1]{0}', space=sflag, size = 0x4, scoped, tag = 'scoped memory for tpu_custom_call.1']
    #allocation7 [shape = 'u8[8192]{0}', space=vmem, size = 0x2000, scoped, tag = 'input window, operand 2, single buffered']
    #allocation8 [shape = 's32[1]{0}', space=sflag, size = 0x4, scoped, tag = 'scoped memory for tpu_custom_call.1']
    #allocation9 [shape = 'u8[8192]{0}', space=vmem, size = 0x2000, scoped, tag = 'output window, operand 0, single buffered']
    %12 = vsyncpa [#allocation5], 0
    %13 = vsyncpa [#allocation8], 0
    %14 = vsyncpa [#allocation6], 0
    // Predicated region
    $region2: #{tpu_custom_call.1} parent=1 // pred_check
      _
    $region3: #{tpu_custom_call.1} parent=1 // pred_check_branch
      %16 = sbr.rel (0) target = $region5
    $region4: #{tpu_custom_call.1} parent=1 // pred_region
      %s18 = ssub.s32 256, 256
      %19 = vsyncadd [#allocation5], %s18
      %s21 = sshll.u32 [#allocation4], 4
      %s22 = int_to_ptr.vmem [resolvable:$true] %s21
      %24 = dma.hbm_to_vmem [thread:$0]  %s1, 256, %s22, [#allocation5]
    $region5: #{tpu_custom_call.1} parent=1 // pred_fallthru
      _
    // Predicated region
    $region6: #{tpu_custom_call.1} parent=1 // pred_check
      _
    $region7: #{tpu_custom_call.1} parent=1 // pred_check_branch
      %26 = sbr.rel (0) target = $region9
    $region8: #{tpu_custom_call.1} parent=1 // pred_region
      %s28 = ssub.s32 256, 256
      %29 = vsyncadd [#allocation8], %s28
      %s31 = sshll.u32 [#allocation7], 4
      %s32 = int_to_ptr.vmem [resolvable:$true] %s31
      %34 = dma.hbm_to_vmem [thread:$0]  %s2, 256, %s32, [#allocation8]
    $region9: #{tpu_custom_call.1} parent=1 // pred_fallthru
      _
    // Predicated region
    $region10: #{tpu_custom_call.1} parent=1 // pred_check
      _
    $region11: #{tpu_custom_call.1} parent=1 // pred_check_branch
      %36 = sbr.rel (0) target = $region13
    $region12: #{tpu_custom_call.1} parent=1 // pred_region
      %37 = dma.done [#allocation5], 256
    $region13: #{tpu_custom_call.1} parent=1 // pred_fallthru
      _
    // Predicated region
    $region14: #{tpu_custom_call.1} parent=1 // pred_check
      _
    $region15: #{tpu_custom_call.1} parent=1 // pred_check_branch
      %39 = sbr.rel (0) target = $region17
    $region16: #{tpu_custom_call.1} parent=1 // pred_region
      %40 = dma.done [#allocation8], 256
    $region17: #{tpu_custom_call.1} parent=1 // pred_fallthru
      _
    %v41 = vld [vmem:[#allocation4] sm:$0xff]
    %v42 = vld [vmem:[#allocation4 + $0x8] sm:$0xff]
    %v43 = vld [vmem:[#allocation7] sm:$0xff]
    %v44 = vld [vmem:[#allocation7 + $0x8] sm:$0xff]
    %vm45 = vcmp.eq.f32.partialorder %v43, 0.0
    %vm46 = vcmp.eq.f32.partialorder %v44, 0.0
    %s47 = sld [smem:[#allocation3]]
    %v48 = vstv %s47
    %v49 = vsel %vm45, %v48, 0.0
    %v50 = vsel %vm46, %v48, 0.0
    %vm51 = vcmp.eq.f32.partialorder %v43, 1.0
    %vm52 = vcmp.eq.f32.partialorder %v44, 1.0
    %s53 = sld [smem:[#allocation3 + $0x1]]
    %v54 = vstv %s53
    %v55 = vsel %vm51, %v54, %v49
    %v56 = vsel %vm52, %v54, %v50
    %v57 = vsub.f32 1.0, %v41
    %v58 = vsub.f32 1.0, %v42
    %v59 = vsub.f32 %v57, %v43
    %v60 = vsub.f32 %v58, %v44
    %v61 = vmul.f32 %v41, %v43
    %v62 = vmul.f32 %v42, %v44
    %v63 = vmul.f32 %v61, 2.0
    %v64 = vmul.f32 %v62, 2.0
    %v65 = vadd.f32 %v59, %v63
    %v66 = vadd.f32 %v60, %v64
    %v67 = vsub.f32 1.0, %v65
    %v68 = vsub.f32 1.0, %v66
    %v69 = vmul.f32 %v67, %v67
    %v70 = vmul.f32 %v68, %v68
    %v71 = vmul.f32 %v55, %v69
    %v72 = vmul.f32 %v56, %v70
    %v73 = vsub.f32 0.0, %v71
    %v74 = vsub.f32 0.0, %v72
    %v75 = vlog2.pop %v65
    %v76 = vmul.f32 %v75, 0.6931472
    %v77 = vlog2.pop %v66
    %v78 = vmul.f32 %v77, 0.6931472
    %v79 = vmul.f32 %v73, %v76
    %v80 = vmul.f32 %v74, %v78
    %81 = vst [vmem:[#allocation9] sm:$0xff] %v79
    %82 = vst [vmem:[#allocation9 + $0x8] sm:$0xff] %v80
    // Predicated region
    $region18: #{tpu_custom_call.1} parent=1 // pred_check
      _
    $region19: #{tpu_custom_call.1} parent=1 // pred_check_branch
      %84 = sbr.rel (0) target = $region21
    $region20: #{tpu_custom_call.1} parent=1 // pred_region
      %s86 = ssub.s32 256, 256
      %87 = vsyncadd [#allocation6], %s86
      %s89 = sshll.u32 [#allocation9], 4
      %s90 = int_to_ptr.vmem [resolvable:$true] %s89
      %92 = dma.vmem_to_hbm [thread:$0]  %s90, 256, %s3, [#allocation6]
    $region21: #{tpu_custom_call.1} parent=1 // pred_fallthru
      _
    // Predicated region
    $region22: #{tpu_custom_call.1} parent=1 // pred_check
      _
    $region23: #{tpu_custom_call.1} parent=1 // pred_check_branch
      %94 = sbr.rel (0) target = $region25
    $region24: #{tpu_custom_call.1} parent=1 // pred_region
      %95 = dma.done [#allocation6], 256
    $region25: #{tpu_custom_call.1} parent=1 // pred_fallthru
      _
    %96 = vsyncpa [#allocation5], 1
    %97 = vsyncpa [#allocation8], 1
    %98 = vsyncpa [#allocation6], 1

</llo_original>
